<compile_context>
chip_gen: v7x
topology: tpu7x:2x2x1
jax: 0.10.0
libtpu: 0.0.40
codegen_flags: <defaults>
</compile_context>

<pallas_src>
import jax
import jax.numpy as jnp
from jax.experimental import pallas as pl
from jax.experimental.pallas import tpu as pltpu

HIDDEN = 768


def _linear_relu_kernel(x_ref, w_ref, b_ref, o_ref):
    # x_ref: (B, 768) f32/bf16; w_ref: (768, TN) bf16 pre-transposed [in, out] slice;
    # b_ref: (1, TN) f32; o_ref: (B, TN).
    x = x_ref[...].astype(jnp.bfloat16)
    # y[b, n] = sum_k x[b, k] * Wt[k, n]   (== x @ W.T of the torch Linear)
    y = jnp.dot(x, w_ref[...], preferred_element_type=jnp.float32)
    y = y + b_ref[...]                      # f32 epilogue (bias broadcast over rows)
    o_ref[...] = jnp.maximum(y, 0.0).astype(o_ref.dtype)


def swin_affwild_head(features, weight_t_bf16, bias, *, n_split=2):
    """features: [B, 768] f32 or bf16;
    weight_t_bf16: pre-transposed [in=768, out=768] bf16 (one-time init-time prep);
    bias: [768] f32."""
    B, K = features.shape
    assert K == HIDDEN
    assert weight_t_bf16.shape == (HIDDEN, HIDDEN)
    assert bias.shape == (HIDDEN,)
    assert HIDDEN % n_split == 0
    TN = HIDDEN // n_split
    assert TN % 128 == 0, "output tile must stay lane-dense"

    b2d = bias.reshape(1, HIDDEN).astype(jnp.float32)

    itemsize_x = jnp.dtype(features.dtype).itemsize
    bytes_accessed = (
        B * HIDDEN * itemsize_x * n_split   # x re-fetched per N tile
        + HIDDEN * HIDDEN * 2               # W (bf16), streamed once total
        + HIDDEN * 4                        # bias (f32)
        + B * HIDDEN * itemsize_x           # output
    )

    out = pl.pallas_call(
        _linear_relu_kernel,
        out_shape=jax.ShapeDtypeStruct((B, HIDDEN), features.dtype),
        grid=(n_split,),
        in_specs=[
            # full x (block == full array dims -> (8,128) rule satisfied for B=2)
            pl.BlockSpec((B, HIDDEN), lambda j: (0, 0)),
            # j-th 384-column slab of the pre-transposed weight
            pl.BlockSpec((HIDDEN, TN), lambda j: (0, j)),
            # matching bias slab
            pl.BlockSpec((1, TN), lambda j: (0, j)),
        ],
        out_specs=pl.BlockSpec((B, TN), lambda j: (0, j)),
        compiler_params=pltpu.CompilerParams(
            dimension_semantics=("parallel",),   # dual-TC on v7x, harmless elsewhere
        ),
        cost_estimate=pl.CostEstimate(
            flops=2 * B * HIDDEN * HIDDEN,
            transcendentals=0,
            bytes_accessed=bytes_accessed,
        ),
    )(features, weight_t_bf16, b2d)

    return out


if __name__ == "__main__":
    key = jax.random.PRNGKey(0)
    k_feat, k_w, k_b = jax.random.split(key, 3)

    B = 2  # small batch of backbone features (swin pooled output dim = 768)
    features = jax.random.normal(k_feat, (B, HIDDEN), dtype=jnp.float32)
    # Deterministic "nn.Linear(768, 768)"-shaped parameters (torch layout [out, in]).
    weight = jax.random.normal(k_w, (HIDDEN, HIDDEN), dtype=jnp.float32) * 0.02
    bias = jax.random.normal(k_b, (HIDDEN,), dtype=jnp.float32) * 0.02

    # One-time parameter preparation (init-time, not per-call):
    # transpose to [in, out] and store in bf16.
    weight_t_bf16 = jnp.asarray(weight.T, dtype=jnp.bfloat16)

    out = swin_affwild_head(features, weight_t_bf16, bias)
    out = jax.block_until_ready(out)
    assert out.shape == (B, HIDDEN)

    # bf16-consistent reference (same input rounding, f32 accumulation).
    ref_bf16 = jnp.maximum(
        jnp.dot(
            features.astype(jnp.bfloat16),
            weight_t_bf16,
            preferred_element_type=jnp.float32,
        )
        + bias,
        0.0,
    )
    # Full-f32 reference of the original module (looser tolerance due to bf16 weights).
    ref_f32 = jnp.maximum(features @ weight.T + bias, 0.0)

    assert jnp.allclose(out, ref_bf16, atol=2e-3, rtol=2e-3), "mismatch vs bf16 reference"
    assert jnp.allclose(out, ref_f32, atol=5e-2, rtol=5e-2), "mismatch vs f32 reference"
    print("KERNEL_OK")
</pallas_src>

<mosaic_0001>
module attributes {stable_mosaic.version = 11 : i64} {
  func.func @_linear_relu_kernel(%arg0: i32, %arg1: memref<2x768xf32, #tpu.memory_space<vmem>>, %arg2: memref<768x384xbf16, #tpu.memory_space<vmem>>, %arg3: memref<1x384xf32, #tpu.memory_space<vmem>>, %arg4: memref<2x384xf32, #tpu.memory_space<vmem>>) attributes {dimension_semantics = [#tpu.dimension_semantics<parallel>], iteration_bounds = array<i64: 2>, scalar_prefetch = 0 : i64, scratch_operands = 0 : i64, tpu.core_type = #tpu.core_type<tc>, window_params = [{pipeline_mode = #tpu.pipeline_mode<synchronous>, transform_indices = @transform_0, window_bounds = array<i64: 2, 768>}, {transform_indices = @transform_1, window_bounds = array<i64: 768, 384>}, {transform_indices = @transform_2, window_bounds = array<i64: 1, 384>}, {transform_indices = @transform_3, window_bounds = array<i64: 2, 384>}]} {
    %c0 = arith.constant 0 : index
    %c0_0 = arith.constant 0 : index
    %0 = vector.load %arg1[%c0, %c0_0] : memref<2x768xf32, #tpu.memory_space<vmem>>, vector<2x768xf32>
    %1 = arith.truncf %0 : vector<2x768xf32> to vector<2x768xbf16>
    %c0_1 = arith.constant 0 : index
    %c0_2 = arith.constant 0 : index
    %2 = vector.load %arg2[%c0_1, %c0_2] : memref<768x384xbf16, #tpu.memory_space<vmem>>, vector<768x384xbf16>
    %cst = arith.constant dense<0.000000e+00> : vector<2x384xf32>
    %3 = tpu.matmul %1, %2, %cst {dimension_numbers = #tpu.dot_dimension_numbers<[1], [0], [0], [1], [0, 0, 1, 1], [], []>} : vector<2x768xbf16>, vector<768x384xbf16>, vector<2x384xf32> -> vector<2x384xf32>
    %c0_3 = arith.constant 0 : index
    %c0_4 = arith.constant 0 : index
    %4 = vector.load %arg3[%c0_3, %c0_4] : memref<1x384xf32, #tpu.memory_space<vmem>>, vector<1x384xf32>
    %5 = vector.broadcast %4 : vector<1x384xf32> to vector<2x384xf32>
    %6 = arith.addf %3, %5 : vector<2x384xf32>
    %cst_5 = arith.constant 0.000000e+00 : f32
    %7 = vector.broadcast %cst_5 : f32 to vector<2x384xf32>
    %8 = arith.maximumf %6, %7 : vector<2x384xf32>
    %c0_6 = arith.constant 0 : index
    %c0_7 = arith.constant 0 : index
    %9 = vector.load %arg4[%c0_6, %c0_7] : memref<2x384xf32, #tpu.memory_space<vmem>>, vector<2x384xf32>
    tpu.vector_store %arg4[%c0_6, %c0_7], %8 {strides = array<i32>} : memref<2x384xf32, #tpu.memory_space<vmem>>, vector<2x384xf32>,
    return
  }
  func.func @transform_0(%arg0: i32) -> (i32, i32) {
    %c0_i32 = arith.constant 0 : i32
    %c0_i32_0 = arith.constant 0 : i32
    %c0_i32_1 = arith.constant 0 : i32
    return %c0_i32, %c0_i32_0 : i32, i32
  }
  func.func @transform_1(%arg0: i32) -> (i32, i32) {
    %c0_i32 = arith.constant 0 : i32
    %c0_i32_0 = arith.constant 0 : i32
    return %c0_i32, %arg0 : i32, i32
  }
  func.func @transform_2(%arg0: i32) -> (i32, i32) {
    %c0_i32 = arith.constant 0 : i32
    %c0_i32_0 = arith.constant 0 : i32
    return %c0_i32, %arg0 : i32, i32
  }
  func.func @transform_3(%arg0: i32) -> (i32, i32) {
    %c0_i32 = arith.constant 0 : i32
    %c0_i32_0 = arith.constant 0 : i32
    return %c0_i32, %arg0 : i32, i32
  }
}

</mosaic_0001>

<llo_original>
// kernel: tpu_custom_call.1
$region0: #{tpu_custom_call.1}
  #allocation0 [shape = 'u32[]', space=smem, size = 0x4, offset = 0x4, fixed_abs, tag = 'smem constant byte address 0x4 - core index']
  #allocation1 [shape = 'u32[144,128]{1,0:T(1,128)}', space=vmem, size = 0x12000, scoped, tag = 'internal scratch']
  %s0 = inlined_call_operand.hbm [shape: f32[2,768], index: 0, kind: input, shape index: {}]
  %s1 = inlined_call_operand.hbm [shape: bf16[768,768], index: 1, kind: input, shape index: {}]
  %s2 = inlined_call_operand.hbm [shape: f32[1,768], index: 2, kind: input, shape index: {}]
  %s3 = inlined_call_operand.hbm [shape: f32[2,768], index: 3, kind: output, shape index: {}]
  %s4 = sld [smem:[#allocation0]]
  $region57: #{tpu_custom_call.1} parent=0
    _
  %s6 = ssub.s32 1, %s4
  %s7 = scalar_select 0, %s6, %s4
  $region1: #{tpu_custom_call.1} parent=0
    #allocation2 [shape = 'u8[6144]{0}', space=vmem, size = 0x1800, scoped, tag = 'input window, operand 0, single buffered']
    #allocation3 [shape = 's32[2]{0}', space=sflag, size = 0x8, scoped, tag = 'scoped memory for tpu_custom_call.1']
    #allocation4 [shape = 's32[2]{0}', space=sflag, size = 0x8, scoped, tag = 'scoped memory for tpu_custom_call.1']
    #allocation5 [shape = 'u8[1179648]{0}', space=vmem, size = 0x120000, scoped, tag = 'input window, operand 1']
    #allocation6 [shape = 's32[2]{0}', space=sflag, size = 0x8, scoped, tag = 'scoped memory for tpu_custom_call.1']
    #allocation7 [shape = 'u8[3072]{0}', space=vmem, size = 0xc00, scoped, tag = 'input window, operand 2']
    #allocation8 [shape = 'u8[6144]{0}', space=vmem, size = 0x1800, scoped, tag = 'output window, operand 0']
    %8 = vsyncpa [#allocation3], 0
    %9 = vsyncpa [#allocation6], 0
    %s10 = scalar_lea.sflag [#allocation6], 1
    %11 = vsyncpa %s10, 0
    %12 = vsyncpa [#allocation4], 0
    %s13 = scalar_lea.sflag [#allocation4], 1
    %14 = vsyncpa %s13, 0
    loop: start=0, step=1, limit=4
    $region2: #{tpu_custom_call.1} parent=1 // loop_pre_header
      _
    $region3: #{tpu_custom_call.1} parent=1 // loop_header
      %s16 = sphi 0, %s20
      %p17 = scmp.ge.s32.totalorder %s16, 4
      %s24 = sphi 0, %s24
      %s26 = sphi 0, %s24
      %s27 = sphi 0, %s26
      %s41 = sphi 0, %s27
      %s47 = sphi 0, %s49
      %s50 = sphi 0, %s47
      %s51 = sphi 0, %s50
      %s67 = sphi 0, %s51
      %s73 = sphi 0, %s75
      %s76 = sphi 0, %s73
      %s77 = sphi 0, %s76
      %s93 = sphi 0, %s77
      %s99 = sphi 0, %s101
      %s102 = sphi 0, %s99
      %s103 = sphi 0, %s102
      %s119 = sphi 0, %s103
    $region4: #{tpu_custom_call.1} parent=1 // loop_header_branch
      %19 = sbr.rel (%p17) target = $region8
    $region5: #{tpu_custom_call.1} parent=1 // loop_body
      %s21 = ssub.s32 %s16, 1
      %s22 = ssub.s32 %s16, 2
      %s23 = sadd.s32 %s16, 1
      %s25 = sadd.s32 %s24, 1
      %p28 = scmp.eq.s32.totalorder %s16, 1
      %p29 = scmp.ne.s32.totalorder %s24, %s26
      %p30 = scmp.eq.s32.totalorder %s16, 0
      %p31 = por %p29, %p30
      %p32 = scmp.ne.s32.totalorder %s24, %s26
      %p33 = scmp.eq.s32.totalorder %s21, 1
      %p34 = por %p32, %p33
      %p35 = scmp.ne.s32.totalorder %s26, %s27
      %p36 = scmp.eq.s32.totalorder %s21, 0
      %p37 = por %p35, %p36
      %p38 = scmp.ne.s32.totalorder %s26, %s27
      %p39 = scmp.eq.s32.totalorder %s22, 1
      %p40 = por %p38, %p39
      %p42 = scmp.ne.s32.totalorder %s27, %s41
      %p43 = scmp.eq.s32.totalorder %s22, 0
      %p44 = por %p42, %p43
      %s45 = ssub.s32 %s16, %s23
      %p46 = scmp.eq.s32.totalorder %s45, 0
      %s48 = sadd.s32 %s47, 1
      %s49 = scalar_select %p46, %s47, %s48
      %p52 = pneg %p46
      %p53 = scmp.eq.s32.totalorder %s16, 1
      %p54 = por %p52, %p53
      %p55 = scmp.ne.s32.totalorder %s47, %s50
      %p56 = scmp.eq.s32.totalorder %s16, 0
      %p57 = por %p55, %p56
      %p58 = scmp.ne.s32.totalorder %s47, %s50
      %p59 = scmp.eq.s32.totalorder %s21, 1
      %p60 = por %p58, %p59
      %p61 = scmp.ne.s32.totalorder %s50, %s51
      %p62 = scmp.eq.s32.totalorder %s21, 0
      %p63 = por %p61, %p62
      %p64 = scmp.ne.s32.totalorder %s50, %s51
      %p65 = scmp.eq.s32.totalorder %s22, 1
      %p66 = por %p64, %p65
      %p68 = scmp.ne.s32.totalorder %s51, %s67
      %p69 = scmp.eq.s32.totalorder %s22, 0
      %p70 = por %p68, %p69
      %s71 = ssub.s32 %s16, %s23
      %p72 = scmp.eq.s32.totalorder %s71, 0
      %s74 = sadd.s32 %s73, 1
      %s75 = scalar_select %p72, %s73, %s74
      %p78 = pneg %p72
      %p79 = scmp.eq.s32.totalorder %s16, 1
      %p80 = por %p78, %p79
      %p81 = scmp.ne.s32.totalorder %s73, %s76
      %p82 = scmp.eq.s32.totalorder %s16, 0
      %p83 = por %p81, %p82
      %p84 = scmp.ne.s32.totalorder %s73, %s76
      %p85 = scmp.eq.s32.totalorder %s21, 1
      %p86 = por %p84, %p85
      %p87 = scmp.ne.s32.totalorder %s76, %s77
      %p88 = scmp.eq.s32.totalorder %s21, 0
      %p89 = por %p87, %p88
      %p90 = scmp.ne.s32.totalorder %s76, %s77
      %p91 = scmp.eq.s32.totalorder %s22, 1
      %p92 = por %p90, %p91
      %p94 = scmp.ne.s32.totalorder %s77, %s93
      %p95 = scmp.eq.s32.totalorder %s22, 0
      %p96 = por %p94, %p95
      %s97 = ssub.s32 %s16, %s23
      %p98 = scmp.eq.s32.totalorder %s97, 0
      %s100 = sadd.s32 %s99, 1
      %s101 = scalar_select %p98, %s99, %s100
      %p104 = pneg %p98
      %p105 = scmp.eq.s32.totalorder %s16, 1
      %p106 = por %p104, %p105
      %p107 = scmp.ne.s32.totalorder %s99, %s102
      %p108 = scmp.eq.s32.totalorder %s16, 0
      %p109 = por %p107, %p108
      %p110 = scmp.ne.s32.totalorder %s99, %s102
      %p111 = scmp.eq.s32.totalorder %s21, 1
      %p112 = por %p110, %p111
      %p113 = scmp.ne.s32.totalorder %s102, %s103
      %p114 = scmp.eq.s32.totalorder %s21, 0
      %p115 = por %p113, %p114
      %p116 = scmp.ne.s32.totalorder %s102, %s103
      %p117 = scmp.eq.s32.totalorder %s22, 1
      %p118 = por %p116, %p117
      %p120 = scmp.ne.s32.totalorder %s103, %s119
      %p121 = scmp.eq.s32.totalorder %s22, 0
      %p122 = por %p120, %p121
      %p123 = scmp.le.s32.totalorder 1, %s16
      %p124 = scmp.lt.s32.totalorder %s16, 3
      %p125 = pnand %p123, %p124
      %p126 = pneg %p125
      // Predicated region
      $region9: #{tpu_custom_call.1} parent=5 // pred_check
        _
      $region10: #{tpu_custom_call.1} parent=5 // pred_check_branch
        %128 = sbr.rel (%p125) target = $region12
      $region11: #{tpu_custom_call.1} parent=5 // pred_region
        %s129 = ssub.s32 %s16, 1
        // Predicated region
        $region13: #{tpu_custom_call.1} parent=11 // pred_check
          %p130 = pneg %p37
        $region14: #{tpu_custom_call.1} parent=11 // pred_check_branch
          %132 = sbr.rel (%p130) target = $region16
        $region15: #{tpu_custom_call.1} parent=11 // pred_region
          %s134 = ssub.s32 192, 192
          %135 = vsyncadd [#allocation3], %s134
          %s137 = sshll.u32 [#allocation2], 4
          %s138 = int_to_ptr.vmem [resolvable:$true] %s137
          %140 = dma.hbm_to_vmem [thread:$0]  %s0, 192, %s138, [#allocation3]
        $region16: #{tpu_custom_call.1} parent=11 // pred_fallthru
          _
      $region12: #{tpu_custom_call.1} parent=5 // pred_fallthru
        _
      %p141 = scmp.lt.s32.totalorder %s16, 2
      // Predicated region
      $region17: #{tpu_custom_call.1} parent=5 // pred_check
        %p142 = pneg %p141
      $region18: #{tpu_custom_call.1} parent=5 // pred_check_branch
        %144 = sbr.rel (%p142) target = $region20
      $region19: #{tpu_custom_call.1} parent=5 // pred_region
        // Predicated region
        $region21: #{tpu_custom_call.1} parent=19 // pred_check
          %p145 = pneg %p57
        $region22: #{tpu_custom_call.1} parent=19 // pred_check_branch
          %147 = sbr.rel (%p145) target = $region24
        $region23: #{tpu_custom_call.1} parent=19 // pred_region
          %s148 = sand.u32 %s16, 1
          %s149 = scalar_lea.sflag [#allocation6], %s148
          %s150 = sand.u32 %s47, 1
          %s151 = smul.addr %s150, 1152
          %s152 = scalar_lea.vmem [#allocation5], %s151
          %s153 = smul.u32 3, %s16
          %s155 = ssub.s32 18432, 18432
          %156 = vsyncadd %s149, %s155
          %s157 = smul.addr %s153, 64
          %s158 = scalar_lea.hbm %s1, %s157
          %s159 = sshll.u32 %s152, 4
          %s160 = int_to_ptr.vmem [resolvable:$true] %s159
          %165 = dma.hbm_to_vmem [thread:$0]  %s158, 18432, %s160, %s149, 384, 192, 12
        $region24: #{tpu_custom_call.1} parent=19 // pred_fallthru
          _
        // Predicated region
        $region25: #{tpu_custom_call.1} parent=19 // pred_check
          %p166 = pneg %p83
        $region26: #{tpu_custom_call.1} parent=19 // pred_check_branch
          %168 = sbr.rel (%p166) target = $region28
        $region27: #{tpu_custom_call.1} parent=19 // pred_region
          %s169 = sand.u32 %s16, 1
          %s170 = scalar_lea.sflag [#allocation6], %s169
          %s171 = sand.u32 %s73, 1
          %s172 = smul.addr %s171, 3
          %s173 = scalar_lea.vmem [#allocation7], %s172
          %s174 = smul.u32 3, %s16
          %s176 = ssub.s32 48, 48
          %177 = vsyncadd %s170, %s176
          %s178 = smul.addr %s174, 16
          %s179 = scalar_lea.hbm %s2, %s178
          %s181 = sshll.u32 %s173, 4
          %s182 = int_to_ptr.vmem [resolvable:$true] %s181
          %184 = dma.hbm_to_vmem [thread:$0]  %s179, 48, %s182, %s170
        $region28: #{tpu_custom_call.1} parent=19 // pred_fallthru
          _
      $region20: #{tpu_custom_call.1} parent=5 // pred_fallthru
        _
      %p185 = scmp.le.s32.totalorder 1, %s16
      %p186 = scmp.lt.s32.totalorder %s16, 3
      %p187 = pnand %p185, %p186
      %p188 = pneg %p187
      // Predicated region
      $region29: #{tpu_custom_call.1} parent=5 // pred_check
        _
      $region30: #{tpu_custom_call.1} parent=5 // pred_check_branch
        %190 = sbr.rel (%p187) target = $region32
      $region31: #{tpu_custom_call.1} parent=5 // pred_region
        %s191 = ssub.s32 %s16, 1
        // Predicated region
        $region33: #{tpu_custom_call.1} parent=31 // pred_check
          %p192 = pneg %p37
        $region34: #{tpu_custom_call.1} parent=31 // pred_check_branch
          %194 = sbr.rel (%p192) target = $region36
        $region35: #{tpu_custom_call.1} parent=31 // pred_region
          %195 = dma.done [#allocation3], 192
        $region36: #{tpu_custom_call.1} parent=31 // pred_fallthru
          _
        %s196 = sand.u32 %s21, 1
        %s197 = scalar_lea.sflag [#allocation6], %s196
        %s198 = sand.u32 %s50, 1
        %s199 = smul.addr %s198, 1152
        %s200 = scalar_lea.vmem [#allocation5], %s199
        // Predicated region
        $region37: #{tpu_custom_call.1} parent=31 // pred_check
          %p201 = pneg %p63
        $region38: #{tpu_custom_call.1} parent=31 // pred_check_branch
          %203 = sbr.rel (%p201) target = $region40
        $region39: #{tpu_custom_call.1} parent=31 // pred_region
          %204 = dma.done %s197, 18432
        $region40: #{tpu_custom_call.1} parent=31 // pred_fallthru
          _
        %s205 = sand.u32 %s21, 1
        %s206 = scalar_lea.sflag [#allocation6], %s205
        %s207 = sand.u32 %s76, 1
        %s208 = smul.addr %s207, 3
        %s209 = scalar_lea.vmem [#allocation7], %s208
        // Predicated region
        $region41: #{tpu_custom_call.1} parent=31 // pred_check
          %p210 = pneg %p89
        $region42: #{tpu_custom_call.1} parent=31 // pred_check_branch
          %212 = sbr.rel (%p210) target = $region44
        $region43: #{tpu_custom_call.1} parent=31 // pred_region
          %213 = dma.done %s206, 48
        $region44: #{tpu_custom_call.1} parent=31 // pred_fallthru
          _
        %p214 = pneg %p37
        %p215 = pneg %p34
        %s216 = sand.u32 %s21, 1
        %s217 = scalar_lea.sflag [#allocation6], %s216
        %s218 = sand.u32 %s50, 1
        %s219 = smul.addr %s218, 1152
        %s220 = scalar_lea.vmem [#allocation5], %s219
        %p221 = pneg %p63
        %p222 = pneg %p60
        %s223 = sand.u32 %s21, 1
        %s224 = scalar_lea.sflag [#allocation6], %s223
        %s225 = sand.u32 %s76, 1
        %s226 = smul.addr %s225, 3
        %s227 = scalar_lea.vmem [#allocation7], %s226
        %p228 = pneg %p89
        %p229 = pneg %p86
        %p230 = pneg %p115
        %p231 = pneg %p112
        %s232 = sand.u32 %s102, 1
        %s233 = scalar_lea.sflag [#allocation4], %s232
        %s234 = sand.u32 %s102, 1
        %s235 = smul.addr %s234, 6
        %s236 = scalar_lea.vmem [#allocation8], %s235
        %s237 = smul.u32 3, %s21
        %s238 = smul.u32 3, %s21
        %s239 = smul.u32 3, %s21
        %v241 = vld [vmem:[#allocation2] sm:$0xff]
        %v242 = vld [vmem:[#allocation2 + $0x8] sm:$0xf]
        %v245 = vcombine.high %v241, %v241
        %v247 = vunpack.c.l.s4 1983009808
        %v248 = vunpack.c.0.s8 %v247
        %v249 = vlaneseq
        %v250 = vshrl.u32 %v249, 7
        %v251 = vsub.s32 %v248, %v250
        %v252 = vrot.slane %v241, %v251
        %v254 = vunpack.c.l.s4 1983009808
        %v255 = vunpack.c.0.s8 %v254
        %v256 = vlaneseq
        %v257 = vshrl.u32 %v256, 7
        %v258 = vsub.s32 %v255, %v257
        %v259 = vrot.slane %v245, %v258
        %v260 = vcombine.high %v252, %v252
        %v261 = vcombine.high %v259, %v259
        %v263 = vunpack.c.l.s4 1983009808
        %v264 = vunpack.c.0.s8 %v263
        %v265 = vlaneseq
        %v266 = vshrl.u32 %v265, 7
        %v267 = vsub.s32 %v264, %v266
        %v268 = vrot.slane %v242, %v267
        %v269 = vcombine.high %v268, %v268
        %v276 = vpack.c.bf16 %v252, %v252
        %v277 = vpack.c.bf16 %v260, %v260
        %v278 = vpack.c.bf16 %v259, %v259
        %v279 = vpack.c.bf16 %v261, %v261
        %v280 = vpack.c.bf16 %v268, %v268
        %v281 = vpack.c.bf16 %v269, %v269
        %v282 = vld [vmem:[%s200] sm:$0xff]
        %v283 = vld [vmem:[%s200 + $0x8] sm:$0xf]
        %v284 = vld [vmem:[%s200 + $0xc] sm:$0xff]
        %v285 = vld [vmem:[%s200 + $0x14] sm:$0xf]
        %v286 = vld [vmem:[%s200 + $0x18] sm:$0xff]
        %v287 = vld [vmem:[%s200 + $0x20] sm:$0xf]
        %v288 = vld [vmem:[%s200 + $0x24] sm:$0xff]
        %v289 = vld [vmem:[%s200 + $0x2c] sm:$0xf]
        %v290 = vld [vmem:[%s200 + $0x30] sm:$0xff]
        %v291 = vld [vmem:[%s200 + $0x38] sm:$0xf]
        %v292 = vld [vmem:[%s200 + $0x3c] sm:$0xff]
        %v293 = vld [vmem:[%s200 + $0x44] sm:$0xf]
        %v294 = vld [vmem:[%s200 + $0x48] sm:$0xff]
        %v295 = vld [vmem:[%s200 + $0x50] sm:$0xf]
        %v296 = vld [vmem:[%s200 + $0x54] sm:$0xff]
        %v297 = vld [vmem:[%s200 + $0x5c] sm:$0xf]
        %v298 = vld [vmem:[%s200 + $0x60] sm:$0xff]
        %v299 = vld [vmem:[%s200 + $0x68] sm:$0xf]
        %v300 = vld [vmem:[%s200 + $0x6c] sm:$0xff]
        %v301 = vld [vmem:[%s200 + $0x74] sm:$0xf]
        %v302 = vld [vmem:[%s200 + $0x78] sm:$0xff]
        %v303 = vld [vmem:[%s200 + $0x80] sm:$0xf]
        %v304 = vld [vmem:[%s200 + $0x84] sm:$0xff]
        %v305 = vld [vmem:[%s200 + $0x8c] sm:$0xf]
        %v306 = vld [vmem:[%s200 + $0x90] sm:$0xff]
        %v307 = vld [vmem:[%s200 + $0x98] sm:$0xf]
        %v308 = vld [vmem:[%s200 + $0x9c] sm:$0xff]
        %v309 = vld [vmem:[%s200 + $0xa4] sm:$0xf]
        %v310 = vld [vmem:[%s200 + $0xa8] sm:$0xff]
        %v311 = vld [vmem:[%s200 + $0xb0] sm:$0xf]
        %v312 = vld [vmem:[%s200 + $0xb4] sm:$0xff]
        %v313 = vld [vmem:[%s200 + $0xbc] sm:$0xf]
        %v314 = vld [vmem:[%s200 + $0xc0] sm:$0xff]
        %v315 = vld [vmem:[%s200 + $0xc8] sm:$0xf]
        %v316 = vld [vmem:[%s200 + $0xcc] sm:$0xff]
        %v317 = vld [vmem:[%s200 + $0xd4] sm:$0xf]
        %v318 = vld [vmem:[%s200 + $0xd8] sm:$0xff]
        %v319 = vld [vmem:[%s200 + $0xe0] sm:$0xf]
        %v320 = vld [vmem:[%s200 + $0xe4] sm:$0xff]
        %v321 = vld [vmem:[%s200 + $0xec] sm:$0xf]
        %v322 = vld [vmem:[%s200 + $0xf0] sm:$0xff]
        %v323 = vld [vmem:[%s200 + $0xf8] sm:$0xf]
        %v324 = vld [vmem:[%s200 + $0xfc] sm:$0xff]
        %v325 = vld [vmem:[%s200 + $0x104] sm:$0xf]
        %v326 = vld [vmem:[%s200 + $0x108] sm:$0xff]
        %v327 = vld [vmem:[%s200 + $0x110] sm:$0xf]
        %v328 = vld [vmem:[%s200 + $0x114] sm:$0xff]
        %v329 = vld [vmem:[%s200 + $0x11c] sm:$0xf]
        %v330 = vld [vmem:[%s200 + $0x120] sm:$0xff]
        %v331 = vld [vmem:[%s200 + $0x128] sm:$0xf]
        %v332 = vld [vmem:[%s200 + $0x12c] sm:$0xff]
        %v333 = vld [vmem:[%s200 + $0x134] sm:$0xf]
        %v334 = vld [vmem:[%s200 + $0x138] sm:$0xff]
        %v335 = vld [vmem:[%s200 + $0x140] sm:$0xf]
        %v336 = vld [vmem:[%s200 + $0x144] sm:$0xff]
        %v337 = vld [vmem:[%s200 + $0x14c] sm:$0xf]
        %v338 = vld [vmem:[%s200 + $0x150] sm:$0xff]
        %v339 = vld [vmem:[%s200 + $0x158] sm:$0xf]
        %v340 = vld [vmem:[%s200 + $0x15c] sm:$0xff]
        %v341 = vld [vmem:[%s200 + $0x164] sm:$0xf]
        %v342 = vld [vmem:[%s200 + $0x168] sm:$0xff]
        %v343 = vld [vmem:[%s200 + $0x170] sm:$0xf]
        %v344 = vld [vmem:[%s200 + $0x174] sm:$0xff]
        %v345 = vld [vmem:[%s200 + $0x17c] sm:$0xf]
        %v346 = vld [vmem:[%s200 + $0x180] sm:$0xff]
        %v347 = vld [vmem:[%s200 + $0x188] sm:$0xf]
        %v348 = vld [vmem:[%s200 + $0x18c] sm:$0xff]
        %v349 = vld [vmem:[%s200 + $0x194] sm:$0xf]
        %v350 = vld [vmem:[%s200 + $0x198] sm:$0xff]
        %v351 = vld [vmem:[%s200 + $0x1a0] sm:$0xf]
        %v352 = vld [vmem:[%s200 + $0x1a4] sm:$0xff]
        %v353 = vld [vmem:[%s200 + $0x1ac] sm:$0xf]
        %v354 = vld [vmem:[%s200 + $0x1b0] sm:$0xff]
        %v355 = vld [vmem:[%s200 + $0x1b8] sm:$0xf]
        %v356 = vld [vmem:[%s200 + $0x1bc] sm:$0xff]
        %v357 = vld [vmem:[%s200 + $0x1c4] sm:$0xf]
        %v358 = vld [vmem:[%s200 + $0x1c8] sm:$0xff]
        %v359 = vld [vmem:[%s200 + $0x1d0] sm:$0xf]
        %v360 = vld [vmem:[%s200 + $0x1d4] sm:$0xff]
        %v361 = vld [vmem:[%s200 + $0x1dc] sm:$0xf]
        %v362 = vld [vmem:[%s200 + $0x1e0] sm:$0xff]
        %v363 = vld [vmem:[%s200 + $0x1e8] sm:$0xf]
        %v364 = vld [vmem:[%s200 + $0x1ec] sm:$0xff]
        %v365 = vld [vmem:[%s200 + $0x1f4] sm:$0xf]
        %v366 = vld [vmem:[%s200 + $0x1f8] sm:$0xff]
        %v367 = vld [vmem:[%s200 + $0x200] sm:$0xf]
        %v368 = vld [vmem:[%s200 + $0x204] sm:$0xff]
        %v369 = vld [vmem:[%s200 + $0x20c] sm:$0xf]
        %v370 = vld [vmem:[%s200 + $0x210] sm:$0xff]
        %v371 = vld [vmem:[%s200 + $0x218] sm:$0xf]
        %v372 = vld [vmem:[%s200 + $0x21c] sm:$0xff]
        %v373 = vld [vmem:[%s200 + $0x224] sm:$0xf]
        %v374 = vld [vmem:[%s200 + $0x228] sm:$0xff]
        %v375 = vld [vmem:[%s200 + $0x230] sm:$0xf]
        %v376 = vld [vmem:[%s200 + $0x234] sm:$0xff]
        %v377 = vld [vmem:[%s200 + $0x23c] sm:$0xf]
        %v378 = vld [vmem:[%s200 + $0x240] sm:$0xff]
        %v379 = vld [vmem:[%s200 + $0x248] sm:$0xf]
        %v380 = vld [vmem:[%s200 + $0x24c] sm:$0xff]
        %v381 = vld [vmem:[%s200 + $0x254] sm:$0xf]
        %v382 = vld [vmem:[%s200 + $0x258] sm:$0xff]
        %v383 = vld [vmem:[%s200 + $0x260] sm:$0xf]
        %v384 = vld [vmem:[%s200 + $0x264] sm:$0xff]
        %v385 = vld [vmem:[%s200 + $0x26c] sm:$0xf]
        %v386 = vld [vmem:[%s200 + $0x270] sm:$0xff]
        %v387 = vld [vmem:[%s200 + $0x278] sm:$0xf]
        %v388 = vld [vmem:[%s200 + $0x27c] sm:$0xff]
        %v389 = vld [vmem:[%s200 + $0x284] sm:$0xf]
        %v390 = vld [vmem:[%s200 + $0x288] sm:$0xff]
        %v391 = vld [vmem:[%s200 + $0x290] sm:$0xf]
        %v392 = vld [vmem:[%s200 + $0x294] sm:$0xff]
        %v393 = vld [vmem:[%s200 + $0x29c] sm:$0xf]
        %v394 = vld [vmem:[%s200 + $0x2a0] sm:$0xff]
        %v395 = vld [vmem:[%s200 + $0x2a8] sm:$0xf]
        %v396 = vld [vmem:[%s200 + $0x2ac] sm:$0xff]
        %v397 = vld [vmem:[%s200 + $0x2b4] sm:$0xf]
        %v398 = vld [vmem:[%s200 + $0x2b8] sm:$0xff]
        %v399 = vld [vmem:[%s200 + $0x2c0] sm:$0xf]
        %v400 = vld [vmem:[%s200 + $0x2c4] sm:$0xff]
        %v401 = vld [vmem:[%s200 + $0x2cc] sm:$0xf]
        %v402 = vld [vmem:[%s200 + $0x2d0] sm:$0xff]
        %v403 = vld [vmem:[%s200 + $0x2d8] sm:$0xf]
        %v404 = vld [vmem:[%s200 + $0x2dc] sm:$0xff]
        %v405 = vld [vmem:[%s200 + $0x2e4] sm:$0xf]
        %v406 = vld [vmem:[%s200 + $0x2e8] sm:$0xff]
        %v407 = vld [vmem:[%s200 + $0x2f0] sm:$0xf]
        %v408 = vld [vmem:[%s200 + $0x2f4] sm:$0xff]
        %v409 = vld [vmem:[%s200 + $0x2fc] sm:$0xf]
        %v410 = vld [vmem:[%s200 + $0x300] sm:$0xff]
        %v411 = vld [vmem:[%s200 + $0x308] sm:$0xf]
        %v412 = vld [vmem:[%s200 + $0x30c] sm:$0xff]
        %v413 = vld [vmem:[%s200 + $0x314] sm:$0xf]
        %v414 = vld [vmem:[%s200 + $0x318] sm:$0xff]
        %v415 = vld [vmem:[%s200 + $0x320] sm:$0xf]
        %v416 = vld [vmem:[%s200 + $0x324] sm:$0xff]
        %v417 = vld [vmem:[%s200 + $0x32c] sm:$0xf]
        %v418 = vld [vmem:[%s200 + $0x330] sm:$0xff]
        %v419 = vld [vmem:[%s200 + $0x338] sm:$0xf]
        %v420 = vld [vmem:[%s200 + $0x33c] sm:$0xff]
        %v421 = vld [vmem:[%s200 + $0x344] sm:$0xf]
        %v422 = vld [vmem:[%s200 + $0x348] sm:$0xff]
        %v423 = vld [vmem:[%s200 + $0x350] sm:$0xf]
        %v424 = vld [vmem:[%s200 + $0x354] sm:$0xff]
        %v425 = vld [vmem:[%s200 + $0x35c] sm:$0xf]
        %v426 = vld [vmem:[%s200 + $0x360] sm:$0xff]
        %v427 = vld [vmem:[%s200 + $0x368] sm:$0xf]
        %v428 = vld [vmem:[%s200 + $0x36c] sm:$0xff]
        %v429 = vld [vmem:[%s200 + $0x374] sm:$0xf]
        %v430 = vld [vmem:[%s200 + $0x378] sm:$0xff]
        %v431 = vld [vmem:[%s200 + $0x380] sm:$0xf]
        %v432 = vld [vmem:[%s200 + $0x384] sm:$0xff]
        %v433 = vld [vmem:[%s200 + $0x38c] sm:$0xf]
        %v434 = vld [vmem:[%s200 + $0x390] sm:$0xff]
        %v435 = vld [vmem:[%s200 + $0x398] sm:$0xf]
        %v436 = vld [vmem:[%s200 + $0x39c] sm:$0xff]
        %v437 = vld [vmem:[%s200 + $0x3a4] sm:$0xf]
        %v438 = vld [vmem:[%s200 + $0x3a8] sm:$0xff]
        %v439 = vld [vmem:[%s200 + $0x3b0] sm:$0xf]
        %v440 = vld [vmem:[%s200 + $0x3b4] sm:$0xff]
        %v441 = vld [vmem:[%s200 + $0x3bc] sm:$0xf]
        %v442 = vld [vmem:[%s200 + $0x3c0] sm:$0xff]
        %v443 = vld [vmem:[%s200 + $0x3c8] sm:$0xf]
        %v444 = vld [vmem:[%s200 + $0x3cc] sm:$0xff]
        %v445 = vld [vmem:[%s200 + $0x3d4] sm:$0xf]
        %v446 = vld [vmem:[%s200 + $0x3d8] sm:$0xff]
        %v447 = vld [vmem:[%s200 + $0x3e0] sm:$0xf]
        %v448 = vld [vmem:[%s200 + $0x3e4] sm:$0xff]
        %v449 = vld [vmem:[%s200 + $0x3ec] sm:$0xf]
        %v450 = vld [vmem:[%s200 + $0x3f0] sm:$0xff]
        %v451 = vld [vmem:[%s200 + $0x3f8] sm:$0xf]
        %v452 = vld [vmem:[%s200 + $0x3fc] sm:$0xff]
        %v453 = vld [vmem:[%s200 + $0x404] sm:$0xf]
        %v454 = vld [vmem:[%s200 + $0x408] sm:$0xff]
        %v455 = vld [vmem:[%s200 + $0x410] sm:$0xf]
        %v456 = vld [vmem:[%s200 + $0x414] sm:$0xff]
        %v457 = vld [vmem:[%s200 + $0x41c] sm:$0xf]
        %v458 = vld [vmem:[%s200 + $0x420] sm:$0xff]
        %v459 = vld [vmem:[%s200 + $0x428] sm:$0xf]
        %v460 = vld [vmem:[%s200 + $0x42c] sm:$0xff]
        %v461 = vld [vmem:[%s200 + $0x434] sm:$0xf]
        %v462 = vld [vmem:[%s200 + $0x438] sm:$0xff]
        %v463 = vld [vmem:[%s200 + $0x440] sm:$0xf]
        %v464 = vld [vmem:[%s200 + $0x444] sm:$0xff]
        %v465 = vld [vmem:[%s200 + $0x44c] sm:$0xf]
        %v466 = vld [vmem:[%s200 + $0x450] sm:$0xff]
        %v467 = vld [vmem:[%s200 + $0x458] sm:$0xf]
        %v468 = vld [vmem:[%s200 + $0x45c] sm:$0xff]
        %v469 = vld [vmem:[%s200 + $0x464] sm:$0xf]
        %v470 = vld [vmem:[%s200 + $0x468] sm:$0xff]
        %v471 = vld [vmem:[%s200 + $0x470] sm:$0xf]
        %v472 = vld [vmem:[%s200 + $0x474] sm:$0xff]
        %v473 = vld [vmem:[%s200 + $0x47c] sm:$0xf]
        %v474 = vld [vmem:[%s209] sm:$0x7]
        %v476 = vlaneseq
        %v477 = vshrl.u32 %v476, 7
        %v478 = vsub.s32 0, %v477
        %v479 = vrot.slane %v474, %v478
        %v480 = vlaneseq
        %v481 = vshrl.u32 %v480, 7
        %v482 = vsub.s32 1, %v481
        %v483 = vrot.slane %v474, %v482
        %v484 = vlaneseq
        %v485 = vshrl.u32 %v484, 7
        %v486 = vsub.s32 2, %v485
        %v487 = vrot.slane %v474, %v486
        %v683 = vunpack.c.l.b16 %v282
        %v684 = vunpack.c.h.b16 %v282
        %v685 = vunpack.c.l.b16 %v283
        %v686 = vunpack.c.l.b16 %v284
        %v687 = vunpack.c.h.b16 %v284
        %v688 = vunpack.c.l.b16 %v285
        %v689 = vunpack.c.l.b16 %v286
        %v690 = vunpack.c.h.b16 %v286
        %v691 = vunpack.c.l.b16 %v287
        %v692 = vunpack.c.l.b16 %v288
        %v693 = vunpack.c.h.b16 %v288
        %v694 = vunpack.c.l.b16 %v289
        %v695 = vunpack.c.l.b16 %v290
        %v696 = vunpack.c.h.b16 %v290
        %v697 = vunpack.c.l.b16 %v291
        %v698 = vunpack.c.l.b16 %v292
        %v699 = vunpack.c.h.b16 %v292
        %v700 = vunpack.c.l.b16 %v293
        %v701 = vunpack.c.l.b16 %v294
        %v702 = vunpack.c.h.b16 %v294
        %v703 = vunpack.c.l.b16 %v295
        %v704 = vunpack.c.l.b16 %v296
        %v705 = vunpack.c.h.b16 %v296
        %v706 = vunpack.c.l.b16 %v297
        %v707 = vunpack.c.l.b16 %v298
        %v708 = vunpack.c.h.b16 %v298
        %v709 = vunpack.c.l.b16 %v299
        %v710 = vunpack.c.l.b16 %v300
        %v711 = vunpack.c.h.b16 %v300
        %v712 = vunpack.c.l.b16 %v301
        %v713 = vunpack.c.l.b16 %v302
        %v714 = vunpack.c.h.b16 %v302
        %v715 = vunpack.c.l.b16 %v303
        %v716 = vunpack.c.l.b16 %v304
        %v717 = vunpack.c.h.b16 %v304
        %v718 = vunpack.c.l.b16 %v305
        %v719 = vunpack.c.l.b16 %v306
        %v720 = vunpack.c.h.b16 %v306
        %v721 = vunpack.c.l.b16 %v307
        %v722 = vunpack.c.l.b16 %v308
        %v723 = vunpack.c.h.b16 %v308
        %v724 = vunpack.c.l.b16 %v309
        %v725 = vunpack.c.l.b16 %v310
        %v726 = vunpack.c.h.b16 %v310
        %v727 = vunpack.c.l.b16 %v311
        %v728 = vunpack.c.l.b16 %v312
        %v729 = vunpack.c.h.b16 %v312
        %v730 = vunpack.c.l.b16 %v313
        %v731 = vunpack.c.l.b16 %v314
        %v732 = vunpack.c.h.b16 %v314
        %v733 = vunpack.c.l.b16 %v315
        %v734 = vunpack.c.l.b16 %v316
        %v735 = vunpack.c.h.b16 %v316
        %v736 = vunpack.c.l.b16 %v317
        %v737 = vunpack.c.l.b16 %v318
        %v738 = vunpack.c.h.b16 %v318
        %v739 = vunpack.c.l.b16 %v319
        %v740 = vunpack.c.l.b16 %v320
        %v741 = vunpack.c.h.b16 %v320
        %v742 = vunpack.c.l.b16 %v321
        %v743 = vunpack.c.l.b16 %v322
        %v744 = vunpack.c.h.b16 %v322
        %v745 = vunpack.c.l.b16 %v323
        %v746 = vunpack.c.l.b16 %v324
        %v747 = vunpack.c.h.b16 %v324
        %v748 = vunpack.c.l.b16 %v325
        %v749 = vunpack.c.l.b16 %v326
        %v750 = vunpack.c.h.b16 %v326
        %v751 = vunpack.c.l.b16 %v327
        %v752 = vunpack.c.l.b16 %v328
        %v753 = vunpack.c.h.b16 %v328
        %v754 = vunpack.c.l.b16 %v329
        %v755 = vunpack.c.l.b16 %v330
        %v756 = vunpack.c.h.b16 %v330
        %v757 = vunpack.c.l.b16 %v331
        %v758 = vunpack.c.l.b16 %v332
        %v759 = vunpack.c.h.b16 %v332
        %v760 = vunpack.c.l.b16 %v333
        %v761 = vunpack.c.l.b16 %v334
        %v762 = vunpack.c.h.b16 %v334
        %v763 = vunpack.c.l.b16 %v335
        %v764 = vunpack.c.l.b16 %v336
        %v765 = vunpack.c.h.b16 %v336
        %v766 = vunpack.c.l.b16 %v337
        %v767 = vunpack.c.l.b16 %v338
        %v768 = vunpack.c.h.b16 %v338
        %v769 = vunpack.c.l.b16 %v339
        %v770 = vunpack.c.l.b16 %v340
        %v771 = vunpack.c.h.b16 %v340
        %v772 = vunpack.c.l.b16 %v341
        %v773 = vunpack.c.l.b16 %v342
        %v774 = vunpack.c.h.b16 %v342
        %v775 = vunpack.c.l.b16 %v343
        %v776 = vunpack.c.l.b16 %v344
        %v777 = vunpack.c.h.b16 %v344
        %v778 = vunpack.c.l.b16 %v345
        %v779 = vunpack.c.l.b16 %v346
        %v780 = vunpack.c.h.b16 %v346
        %v781 = vunpack.c.l.b16 %v347
        %v782 = vunpack.c.l.b16 %v348
        %v783 = vunpack.c.h.b16 %v348
        %v784 = vunpack.c.l.b16 %v349
        %v785 = vunpack.c.l.b16 %v350
        %v786 = vunpack.c.h.b16 %v350
        %v787 = vunpack.c.l.b16 %v351
        %v788 = vunpack.c.l.b16 %v352
        %v789 = vunpack.c.h.b16 %v352
        %v790 = vunpack.c.l.b16 %v353
        %v791 = vunpack.c.l.b16 %v354
        %v792 = vunpack.c.h.b16 %v354
        %v793 = vunpack.c.l.b16 %v355
        %v794 = vunpack.c.l.b16 %v356
        %v795 = vunpack.c.h.b16 %v356
        %v796 = vunpack.c.l.b16 %v357
        %v797 = vunpack.c.l.b16 %v358
        %v798 = vunpack.c.h.b16 %v358
        %v799 = vunpack.c.l.b16 %v359
        %v800 = vunpack.c.l.b16 %v360
        %v801 = vunpack.c.h.b16 %v360
        %v802 = vunpack.c.l.b16 %v361
        %v803 = vunpack.c.l.b16 %v362
        %v804 = vunpack.c.h.b16 %v362
        %v805 = vunpack.c.l.b16 %v363
        %v806 = vunpack.c.l.b16 %v364
        %v807 = vunpack.c.h.b16 %v364
        %v808 = vunpack.c.l.b16 %v365
        %v809 = vunpack.c.l.b16 %v366
        %v810 = vunpack.c.h.b16 %v366
        %v811 = vunpack.c.l.b16 %v367
        %v812 = vunpack.c.l.b16 %v368
        %v813 = vunpack.c.h.b16 %v368
        %v814 = vunpack.c.l.b16 %v369
        %v815 = vunpack.c.l.b16 %v370
        %v816 = vunpack.c.h.b16 %v370
        %v817 = vunpack.c.l.b16 %v371
        %v818 = vunpack.c.l.b16 %v372
        %v819 = vunpack.c.h.b16 %v372
        %v820 = vunpack.c.l.b16 %v373
        %v821 = vunpack.c.l.b16 %v374
        %v822 = vunpack.c.h.b16 %v374
        %v823 = vunpack.c.l.b16 %v375
        %v824 = vunpack.c.l.b16 %v376
        %v825 = vunpack.c.h.b16 %v376
        %v826 = vunpack.c.l.b16 %v377
        %v827 = vunpack.c.l.b16 %v378
        %v828 = vunpack.c.h.b16 %v378
        %v829 = vunpack.c.l.b16 %v379
        %v830 = vunpack.c.l.b16 %v380
        %v831 = vunpack.c.h.b16 %v380
        %v832 = vunpack.c.l.b16 %v381
        %v833 = vunpack.c.l.b16 %v382
        %v834 = vunpack.c.h.b16 %v382
        %v835 = vunpack.c.l.b16 %v383
        %v836 = vunpack.c.l.b16 %v384
        %v837 = vunpack.c.h.b16 %v384
        %v838 = vunpack.c.l.b16 %v385
        %v839 = vunpack.c.l.b16 %v386
        %v840 = vunpack.c.h.b16 %v386
        %v841 = vunpack.c.l.b16 %v387
        %v842 = vunpack.c.l.b16 %v388
        %v843 = vunpack.c.h.b16 %v388
        %v844 = vunpack.c.l.b16 %v389
        %v845 = vunpack.c.l.b16 %v390
        %v846 = vunpack.c.h.b16 %v390
        %v847 = vunpack.c.l.b16 %v391
        %v848 = vunpack.c.l.b16 %v392
        %v849 = vunpack.c.h.b16 %v392
        %v850 = vunpack.c.l.b16 %v393
        %v851 = vunpack.c.l.b16 %v394
        %v852 = vunpack.c.h.b16 %v394
        %v853 = vunpack.c.l.b16 %v395
        %v854 = vunpack.c.l.b16 %v396
        %v855 = vunpack.c.h.b16 %v396
        %v856 = vunpack.c.l.b16 %v397
        %v857 = vunpack.c.l.b16 %v398
        %v858 = vunpack.c.h.b16 %v398
        %v859 = vunpack.c.l.b16 %v399
        %v860 = vunpack.c.l.b16 %v400
        %v861 = vunpack.c.h.b16 %v400
        %v862 = vunpack.c.l.b16 %v401
        %v863 = vunpack.c.l.b16 %v402
        %v864 = vunpack.c.h.b16 %v402
        %v865 = vunpack.c.l.b16 %v403
        %v866 = vunpack.c.l.b16 %v404
        %v867 = vunpack.c.h.b16 %v404
        %v868 = vunpack.c.l.b16 %v405
        %v869 = vunpack.c.l.b16 %v406
        %v870 = vunpack.c.h.b16 %v406
        %v871 = vunpack.c.l.b16 %v407
        %v872 = vunpack.c.l.b16 %v408
        %v873 = vunpack.c.h.b16 %v408
        %v874 = vunpack.c.l.b16 %v409
        %v875 = vunpack.c.l.b16 %v410
        %v876 = vunpack.c.h.b16 %v410
        %v877 = vunpack.c.l.b16 %v411
        %v878 = vunpack.c.l.b16 %v412
        %v879 = vunpack.c.h.b16 %v412
        %v880 = vunpack.c.l.b16 %v413
        %v881 = vunpack.c.l.b16 %v414
        %v882 = vunpack.c.h.b16 %v414
        %v883 = vunpack.c.l.b16 %v415
        %v884 = vunpack.c.l.b16 %v416
        %v885 = vunpack.c.h.b16 %v416
        %v886 = vunpack.c.l.b16 %v417
        %v887 = vunpack.c.l.b16 %v418
        %v888 = vunpack.c.h.b16 %v418
        %v889 = vunpack.c.l.b16 %v419
        %v890 = vunpack.c.l.b16 %v420
        %v891 = vunpack.c.h.b16 %v420
        %v892 = vunpack.c.l.b16 %v421
        %v893 = vunpack.c.l.b16 %v422
        %v894 = vunpack.c.h.b16 %v422
        %v895 = vunpack.c.l.b16 %v423
        %v896 = vunpack.c.l.b16 %v424
        %v897 = vunpack.c.h.b16 %v424
        %v898 = vunpack.c.l.b16 %v425
        %v899 = vunpack.c.l.b16 %v426
        %v900 = vunpack.c.h.b16 %v426
        %v901 = vunpack.c.l.b16 %v427
        %v902 = vunpack.c.l.b16 %v428
        %v903 = vunpack.c.h.b16 %v428
        %v904 = vunpack.c.l.b16 %v429
        %v905 = vunpack.c.l.b16 %v430
        %v906 = vunpack.c.h.b16 %v430
        %v907 = vunpack.c.l.b16 %v431
        %v908 = vunpack.c.l.b16 %v432
        %v909 = vunpack.c.h.b16 %v432
        %v910 = vunpack.c.l.b16 %v433
        %v911 = vunpack.c.l.b16 %v434
        %v912 = vunpack.c.h.b16 %v434
        %v913 = vunpack.c.l.b16 %v435
        %v914 = vunpack.c.l.b16 %v436
        %v915 = vunpack.c.h.b16 %v436
        %v916 = vunpack.c.l.b16 %v437
        %v917 = vunpack.c.l.b16 %v438
        %v918 = vunpack.c.h.b16 %v438
        %v919 = vunpack.c.l.b16 %v439
        %v920 = vunpack.c.l.b16 %v440
        %v921 = vunpack.c.h.b16 %v440
        %v922 = vunpack.c.l.b16 %v441
        %v923 = vunpack.c.l.b16 %v442
        %v924 = vunpack.c.h.b16 %v442
        %v925 = vunpack.c.l.b16 %v443
        %v926 = vunpack.c.l.b16 %v444
        %v927 = vunpack.c.h.b16 %v444
        %v928 = vunpack.c.l.b16 %v445
        %v929 = vunpack.c.l.b16 %v446
        %v930 = vunpack.c.h.b16 %v446
        %v931 = vunpack.c.l.b16 %v447
        %v932 = vunpack.c.l.b16 %v448
        %v933 = vunpack.c.h.b16 %v448
        %v934 = vunpack.c.l.b16 %v449
        %v935 = vunpack.c.l.b16 %v450
        %v936 = vunpack.c.h.b16 %v450
        %v937 = vunpack.c.l.b16 %v451
        %v938 = vunpack.c.l.b16 %v452
        %v939 = vunpack.c.h.b16 %v452
        %v940 = vunpack.c.l.b16 %v453
        %v941 = vunpack.c.l.b16 %v454
        %v942 = vunpack.c.h.b16 %v454
        %v943 = vunpack.c.l.b16 %v455
        %v944 = vunpack.c.l.b16 %v456
        %v945 = vunpack.c.h.b16 %v456
        %v946 = vunpack.c.l.b16 %v457
        %v947 = vunpack.c.l.b16 %v458
        %v948 = vunpack.c.h.b16 %v458
        %v949 = vunpack.c.l.b16 %v459
        %v950 = vunpack.c.l.b16 %v460
        %v951 = vunpack.c.h.b16 %v460
        %v952 = vunpack.c.l.b16 %v461
        %v953 = vunpack.c.l.b16 %v462
        %v954 = vunpack.c.h.b16 %v462
        %v955 = vunpack.c.l.b16 %v463
        %v956 = vunpack.c.l.b16 %v464
        %v957 = vunpack.c.h.b16 %v464
        %v958 = vunpack.c.l.b16 %v465
        %v959 = vunpack.c.l.b16 %v466
        %v960 = vunpack.c.h.b16 %v466
        %v961 = vunpack.c.l.b16 %v467
        %v962 = vunpack.c.l.b16 %v468
        %v963 = vunpack.c.h.b16 %v468
        %v964 = vunpack.c.l.b16 %v469
        %v965 = vunpack.c.l.b16 %v470
        %v966 = vunpack.c.h.b16 %v470
        %v967 = vunpack.c.l.b16 %v471
        %v968 = vunpack.c.l.b16 %v472
        %v969 = vunpack.c.h.b16 %v472
        %v970 = vunpack.c.l.b16 %v473
        %v971 = vpack.c.b16 %v686, %v683
        %v972 = vpack.c.b16 %v687, %v684
        %v973 = vpack.c.b16 %v688, %v685
        %v974 = vpack.c.b16 %v692, %v689
        %v975 = vpack.c.b16 %v693, %v690
        %v976 = vpack.c.b16 %v694, %v691
        %v977 = vpack.c.b16 %v698, %v695
        %v978 = vpack.c.b16 %v699, %v696
        %v979 = vpack.c.b16 %v700, %v697
        %v980 = vpack.c.b16 %v704, %v701
        %v981 = vpack.c.b16 %v705, %v702
        %v982 = vpack.c.b16 %v706, %v703
        %v983 = vpack.c.b16 %v710, %v707
        %v984 = vpack.c.b16 %v711, %v708
        %v985 = vpack.c.b16 %v712, %v709
        %v986 = vpack.c.b16 %v716, %v713
        %v987 = vpack.c.b16 %v717, %v714
        %v988 = vpack.c.b16 %v718, %v715
        %v989 = vpack.c.b16 %v722, %v719
        %v990 = vpack.c.b16 %v723, %v720
        %v991 = vpack.c.b16 %v724, %v721
        %v992 = vpack.c.b16 %v728, %v725
        %v993 = vpack.c.b16 %v729, %v726
        %v994 = vpack.c.b16 %v730, %v727
        %v995 = vpack.c.b16 %v734, %v731
        %v996 = vpack.c.b16 %v735, %v732
        %v997 = vpack.c.b16 %v736, %v733
        %v998 = vpack.c.b16 %v740, %v737
        %v999 = vpack.c.b16 %v741, %v738
        %v1000 = vpack.c.b16 %v742, %v739
        %v1001 = vpack.c.b16 %v746, %v743
        %v1002 = vpack.c.b16 %v747, %v744
        %v1003 = vpack.c.b16 %v748, %v745
        %v1004 = vpack.c.b16 %v752, %v749
        %v1005 = vpack.c.b16 %v753, %v750
        %v1006 = vpack.c.b16 %v754, %v751
        %v1007 = vpack.c.b16 %v758, %v755
        %v1008 = vpack.c.b16 %v759, %v756
        %v1009 = vpack.c.b16 %v760, %v757
        %v1010 = vpack.c.b16 %v764, %v761
        %v1011 = vpack.c.b16 %v765, %v762
        %v1012 = vpack.c.b16 %v766, %v763
        %v1013 = vpack.c.b16 %v770, %v767
        %v1014 = vpack.c.b16 %v771, %v768
        %v1015 = vpack.c.b16 %v772, %v769
        %v1016 = vpack.c.b16 %v776, %v773
        %v1017 = vpack.c.b16 %v777, %v774
        %v1018 = vpack.c.b16 %v778, %v775
        %v1019 = vpack.c.b16 %v782, %v779
        %v1020 = vpack.c.b16 %v783, %v780
        %v1021 = vpack.c.b16 %v784, %v781
        %v1022 = vpack.c.b16 %v788, %v785
        %v1023 = vpack.c.b16 %v789, %v786
        %v1024 = vpack.c.b16 %v790, %v787
        %v1025 = vpack.c.b16 %v794, %v791
        %v1026 = vpack.c.b16 %v795, %v792
        %v1027 = vpack.c.b16 %v796, %v793
        %v1028 = vpack.c.b16 %v800, %v797
        %v1029 = vpack.c.b16 %v801, %v798
        %v1030 = vpack.c.b16 %v802, %v799
        %v1031 = vpack.c.b16 %v806, %v803
        %v1032 = vpack.c.b16 %v807, %v804
        %v1033 = vpack.c.b16 %v808, %v805
        %v1034 = vpack.c.b16 %v812, %v809
        %v1035 = vpack.c.b16 %v813, %v810
        %v1036 = vpack.c.b16 %v814, %v811
        %v1037 = vpack.c.b16 %v818, %v815
        %v1038 = vpack.c.b16 %v819, %v816
        %v1039 = vpack.c.b16 %v820, %v817
        %v1040 = vpack.c.b16 %v824, %v821
        %v1041 = vpack.c.b16 %v825, %v822
        %v1042 = vpack.c.b16 %v826, %v823
        %v1043 = vpack.c.b16 %v830, %v827
        %v1044 = vpack.c.b16 %v831, %v828
        %v1045 = vpack.c.b16 %v832, %v829
        %v1046 = vpack.c.b16 %v836, %v833
        %v1047 = vpack.c.b16 %v837, %v834
        %v1048 = vpack.c.b16 %v838, %v835
        %v1049 = vpack.c.b16 %v842, %v839
        %v1050 = vpack.c.b16 %v843, %v840
        %v1051 = vpack.c.b16 %v844, %v841
        %v1052 = vpack.c.b16 %v848, %v845
        %v1053 = vpack.c.b16 %v849, %v846
        %v1054 = vpack.c.b16 %v850, %v847
        %v1055 = vpack.c.b16 %v854, %v851
        %v1056 = vpack.c.b16 %v855, %v852
        %v1057 = vpack.c.b16 %v856, %v853
        %v1058 = vpack.c.b16 %v860, %v857
        %v1059 = vpack.c.b16 %v861, %v858
        %v1060 = vpack.c.b16 %v862, %v859
        %v1061 = vpack.c.b16 %v866, %v863
        %v1062 = vpack.c.b16 %v867, %v864
        %v1063 = vpack.c.b16 %v868, %v865
        %v1064 = vpack.c.b16 %v872, %v869
        %v1065 = vpack.c.b16 %v873, %v870
        %v1066 = vpack.c.b16 %v874, %v871
        %v1067 = vpack.c.b16 %v878, %v875
        %v1068 = vpack.c.b16 %v879, %v876
        %v1069 = vpack.c.b16 %v880, %v877
        %v1070 = vpack.c.b16 %v884, %v881
        %v1071 = vpack.c.b16 %v885, %v882
        %v1072 = vpack.c.b16 %v886, %v883
        %v1073 = vpack.c.b16 %v890, %v887
        %v1074 = vpack.c.b16 %v891, %v888
        %v1075 = vpack.c.b16 %v892, %v889
        %v1076 = vpack.c.b16 %v896, %v893
        %v1077 = vpack.c.b16 %v897, %v894
        %v1078 = vpack.c.b16 %v898, %v895
        %v1079 = vpack.c.b16 %v902, %v899
        %v1080 = vpack.c.b16 %v903, %v900
        %v1081 = vpack.c.b16 %v904, %v901
        %v1082 = vpack.c.b16 %v908, %v905
        %v1083 = vpack.c.b16 %v909, %v906
        %v1084 = vpack.c.b16 %v910, %v907
        %v1085 = vpack.c.b16 %v914, %v911
        %v1086 = vpack.c.b16 %v915, %v912
        %v1087 = vpack.c.b16 %v916, %v913
        %v1088 = vpack.c.b16 %v920, %v917
        %v1089 = vpack.c.b16 %v921, %v918
        %v1090 = vpack.c.b16 %v922, %v919
        %v1091 = vpack.c.b16 %v926, %v923
        %v1092 = vpack.c.b16 %v927, %v924
        %v1093 = vpack.c.b16 %v928, %v925
        %v1094 = vpack.c.b16 %v932, %v929
        %v1095 = vpack.c.b16 %v933, %v930
        %v1096 = vpack.c.b16 %v934, %v931
        %v1097 = vpack.c.b16 %v938, %v935
        %v1098 = vpack.c.b16 %v939, %v936
        %v1099 = vpack.c.b16 %v940, %v937
        %v1100 = vpack.c.b16 %v944, %v941
        %v1101 = vpack.c.b16 %v945, %v942
        %v1102 = vpack.c.b16 %v946, %v943
        %v1103 = vpack.c.b16 %v950, %v947
        %v1104 = vpack.c.b16 %v951, %v948
        %v1105 = vpack.c.b16 %v952, %v949
        %v1106 = vpack.c.b16 %v956, %v953
        %v1107 = vpack.c.b16 %v957, %v954
        %v1108 = vpack.c.b16 %v958, %v955
        %v1109 = vpack.c.b16 %v962, %v959
        %v1110 = vpack.c.b16 %v963, %v960
        %v1111 = vpack.c.b16 %v964, %v961
        %v1112 = vpack.c.b16 %v968, %v965
        %v1113 = vpack.c.b16 %v969, %v966
        %v1114 = vpack.c.b16 %v970, %v967
        %1259 = vmatprep.subr.bf16.mxu0 %v972
        %1260 = vmatpush1.bf16.msra.mxu0 %v971
        %1261 = vmatprep.subr.bf16.mxu0 %v975
        %1262 = vmatpush1.bf16.msra.mxu0 %v974
        %1263 = vmatprep.subr.bf16.mxu0 %v978
        %1264 = vmatpush1.bf16.msra.mxu0 %v977
        %1265 = vmatprep.subr.bf16.mxu0 %v981
        %1266 = vmatpush1.bf16.msra.mxu0 %v980
        %1267 = vmatprep.subr.bf16.mxu0 %v984
        %1268 = vmatpush1.bf16.msra.mxu0 %v983
        %1269 = vmatprep.subr.bf16.mxu0 %v987
        %1270 = vmatpush1.bf16.msra.mxu0 %v986
        %1271 = vmatprep.subr.bf16.mxu0 %v990
        %1272 = vmatpush1.bf16.msra.mxu0 %v989
        %1273 = vmatprep.subr.bf16.mxu0 %v993
        %1274 = vmatpush1.bf16.msra.mxu0 %v992
        %1275 = vmatprep.subr.bf16.mxu0 %v996
        %1276 = vmatpush1.bf16.msra.mxu0 %v995
        %1277 = vmatprep.subr.bf16.mxu0 %v999
        %1278 = vmatpush1.bf16.msra.mxu0 %v998
        %1279 = vmatprep.subr.bf16.mxu0 %v1002
        %1280 = vmatpush1.bf16.msra.mxu0 %v1001
        %1281 = vmatprep.subr.bf16.mxu0 %v1005
        %1282 = vmatpush1.bf16.msra.mxu0 %v1004
        %1283 = vmatprep.subr.bf16.mxu0 %v1008
        %1284 = vmatpush1.bf16.msra.mxu0 %v1007
        %1285 = vmatprep.subr.bf16.mxu0 %v1011
        %1286 = vmatpush1.bf16.msra.mxu0 %v1010
        %1287 = vmatprep.subr.bf16.mxu0 %v1014
        %1288 = vmatpush1.bf16.msra.mxu0 %v1013
        %1289 = vmatprep.subr.bf16.mxu0 %v1017
        %1290 = vmatpush1.bf16.msra.mxu0 %v1016
        %1291 = vmatprep.mubr.bf16.mxu0 %v277
        %1292 = vmatmul.mubr.bf16.gmra.mrb[0].mxu0 %v276
        %v1293 = vpop.f32.mrb[0].mxu0
        %v1294 = vadd.f32 %v479, %v1293
        %v1295 = vpop.f32.mrb[0].mxu0
        %v1296 = vadd.f32 %v483, %v1295
        %v1297 = vpop.f32.mrb[0].mxu0
        %v1298 = vpop.f32.mrb[0].mxu0
        %1299 = vdwg.mxu0
        %1300 = vmatprep.subr.bf16.mxu0 %v1020
        %1301 = vmatpush1.bf16.msra.mxu0 %v1019
        %1302 = vmatprep.subr.bf16.mxu0 %v1023
        %1303 = vmatpush1.bf16.msra.mxu0 %v1022
        %1304 = vmatprep.subr.bf16.mxu0 %v1026
        %1305 = vmatpush1.bf16.msra.mxu0 %v1025
        %1306 = vmatprep.subr.bf16.mxu0 %v1029
        %1307 = vmatpush1.bf16.msra.mxu0 %v1028
        %1308 = vmatprep.subr.bf16.mxu0 %v1032
        %1309 = vmatpush1.bf16.msra.mxu0 %v1031
        %1310 = vmatprep.subr.bf16.mxu0 %v1035
        %1311 = vmatpush1.bf16.msra.mxu0 %v1034
        %1312 = vmatprep.subr.bf16.mxu0 %v1038
        %1313 = vmatpush1.bf16.msra.mxu0 %v1037
        %1314 = vmatprep.subr.bf16.mxu0 %v1041
        %1315 = vmatpush1.bf16.msra.mxu0 %v1040
        %1316 = vmatprep.subr.bf16.mxu0 %v1044
        %1317 = vmatpush1.bf16.msra.mxu0 %v1043
        %1318 = vmatprep.subr.bf16.mxu0 %v1047
        %1319 = vmatpush1.bf16.msra.mxu0 %v1046
        %1320 = vmatprep.subr.bf16.mxu0 %v1050
        %1321 = vmatpush1.bf16.msra.mxu0 %v1049
        %1322 = vmatprep.subr.bf16.mxu0 %v1053
        %1323 = vmatpush1.bf16.msra.mxu0 %v1052
        %1324 = vmatprep.subr.bf16.mxu0 %v1056
        %1325 = vmatpush1.bf16.msra.mxu0 %v1055
        %1326 = vmatprep.subr.bf16.mxu0 %v1059
        %1327 = vmatpush1.bf16.msra.mxu0 %v1058
        %1328 = vmatprep.subr.bf16.mxu0 %v1062
        %1329 = vmatpush1.bf16.msra.mxu0 %v1061
        %1330 = vmatprep.subr.bf16.mxu0 %v1065
        %1331 = vmatpush1.bf16.msra.mxu0 %v1064
        %1332 = vmatprep.mubr.bf16.mxu0 %v279
        %1333 = vmatmul.mubr.bf16.gmra.mrb[0].mxu0 %v278
        %v1334 = vpop.f32.mrb[0].mxu0
        %v1335 = vadd.f32 %v1294, %v1334
        %v1336 = vpop.f32.mrb[0].mxu0
        %v1337 = vadd.f32 %v1296, %v1336
        %v1338 = vpop.f32.mrb[0].mxu0
        %v1339 = vpop.f32.mrb[0].mxu0
        %1340 = vdwg.mxu0
        %1341 = vmatprep.subr.bf16.mxu0 %v1068
        %1342 = vmatpush1.bf16.msra.mxu0 %v1067
        %1343 = vmatprep.subr.bf16.mxu0 %v1071
        %1344 = vmatpush1.bf16.msra.mxu0 %v1070
        %1345 = vmatprep.subr.bf16.mxu0 %v1074
        %1346 = vmatpush1.bf16.msra.mxu0 %v1073
        %1347 = vmatprep.subr.bf16.mxu0 %v1077
        %1348 = vmatpush1.bf16.msra.mxu0 %v1076
        %1349 = vmatprep.subr.bf16.mxu0 %v1080
        %1350 = vmatpush1.bf16.msra.mxu0 %v1079
        %1351 = vmatprep.subr.bf16.mxu0 %v1083
        %1352 = vmatpush1.bf16.msra.mxu0 %v1082
        %1353 = vmatprep.subr.bf16.mxu0 %v1086
        %1354 = vmatpush1.bf16.msra.mxu0 %v1085
        %1355 = vmatprep.subr.bf16.mxu0 %v1089
        %1356 = vmatpush1.bf16.msra.mxu0 %v1088
        %1357 = vmatprep.subr.bf16.mxu0 %v1092
        %1358 = vmatpush1.bf16.msra.mxu0 %v1091
        %1359 = vmatprep.subr.bf16.mxu0 %v1095
        %1360 = vmatpush1.bf16.msra.mxu0 %v1094
        %1361 = vmatprep.subr.bf16.mxu0 %v1098
        %1362 = vmatpush1.bf16.msra.mxu0 %v1097
        %1363 = vmatprep.subr.bf16.mxu0 %v1101
        %1364 = vmatpush1.bf16.msra.mxu0 %v1100
        %1365 = vmatprep.subr.bf16.mxu0 %v1104
        %1366 = vmatpush1.bf16.msra.mxu0 %v1103
        %1367 = vmatprep.subr.bf16.mxu0 %v1107
        %1368 = vmatpush1.bf16.msra.mxu0 %v1106
        %1369 = vmatprep.subr.bf16.mxu0 %v1110
        %1370 = vmatpush1.bf16.msra.mxu0 %v1109
        %1371 = vmatprep.subr.bf16.mxu0 %v1113
        %1372 = vmatpush1.bf16.msra.mxu0 %v1112
        %1373 = vmatprep.mubr.bf16.mxu0 %v281
        %1374 = vmatmul.mubr.bf16.gmra.mrb[0].mxu0 %v280
        %v1375 = vpop.f32.mrb[0].mxu0
        %v1376 = vadd.f32 %v1335, %v1375
        %v1377 = vpop.f32.mrb[0].mxu0
        %v1378 = vadd.f32 %v1337, %v1377
        %v1379 = vpop.f32.mrb[0].mxu0
        %v1380 = vpop.f32.mrb[0].mxu0
        %1381 = vdwg.mxu0
        %1382 = vmatprep.subr.bf16.mxu0 0
        %1383 = vmatpush1.bf16.msra.mxu0 %v973
        %1384 = vmatprep.subr.bf16.mxu0 0
        %1385 = vmatpush1.bf16.msra.mxu0 %v976
        %1386 = vmatprep.subr.bf16.mxu0 0
        %1387 = vmatpush1.bf16.msra.mxu0 %v979
        %1388 = vmatprep.subr.bf16.mxu0 0
        %1389 = vmatpush1.bf16.msra.mxu0 %v982
        %1390 = vmatprep.subr.bf16.mxu0 0
        %1391 = vmatpush1.bf16.msra.mxu0 %v985
        %1392 = vmatprep.subr.bf16.mxu0 0
        %1393 = vmatpush1.bf16.msra.mxu0 %v988
        %1394 = vmatprep.subr.bf16.mxu0 0
        %1395 = vmatpush1.bf16.msra.mxu0 %v991
        %1396 = vmatprep.subr.bf16.mxu0 0
        %1397 = vmatpush1.bf16.msra.mxu0 %v994
        %1398 = vmatprep.subr.bf16.mxu0 0
        %1399 = vmatpush1.bf16.msra.mxu0 %v997
        %1400 = vmatprep.subr.bf16.mxu0 0
        %1401 = vmatpush1.bf16.msra.mxu0 %v1000
        %1402 = vmatprep.subr.bf16.mxu0 0
        %1403 = vmatpush1.bf16.msra.mxu0 %v1003
        %1404 = vmatprep.subr.bf16.mxu0 0
        %1405 = vmatpush1.bf16.msra.mxu0 %v1006
        %1406 = vmatprep.subr.bf16.mxu0 0
        %1407 = vmatpush1.bf16.msra.mxu0 %v1009
        %1408 = vmatprep.subr.bf16.mxu0 0
        %1409 = vmatpush1.bf16.msra.mxu0 %v1012
        %1410 = vmatprep.subr.bf16.mxu0 0
        %1411 = vmatpush1.bf16.msra.mxu0 %v1015
        %1412 = vmatprep.subr.bf16.mxu0 0
        %1413 = vmatpush1.bf16.msra.mxu0 %v1018
        %1414 = vmatprep.mubr.bf16.mxu0 %v277
        %1415 = vmatmul.mubr.bf16.gmra.mrb[0].mxu0 %v276
        %v1416 = vpop.f32.mrb[0].mxu0
        %v1417 = vadd.f32 %v487, %v1416
        %v1418 = vpop.f32.mrb[0].mxu0
        %v1419 = vpop.f32.mrb[0].mxu0
        %v1420 = vpop.f32.mrb[0].mxu0
        %1421 = vdwg.mxu0
        %1422 = vmatprep.subr.bf16.mxu0 0
        %1423 = vmatpush1.bf16.msra.mxu0 %v1021
        %1424 = vmatprep.subr.bf16.mxu0 0
        %1425 = vmatpush1.bf16.msra.mxu0 %v1024
        %1426 = vmatprep.subr.bf16.mxu0 0
        %1427 = vmatpush1.bf16.msra.mxu0 %v1027
        %1428 = vmatprep.subr.bf16.mxu0 0
        %1429 = vmatpush1.bf16.msra.mxu0 %v1030
        %1430 = vmatprep.subr.bf16.mxu0 0
        %1431 = vmatpush1.bf16.msra.mxu0 %v1033
        %1432 = vmatprep.subr.bf16.mxu0 0
        %1433 = vmatpush1.bf16.msra.mxu0 %v1036
        %1434 = vmatprep.subr.bf16.mxu0 0
        %1435 = vmatpush1.bf16.msra.mxu0 %v1039
        %1436 = vmatprep.subr.bf16.mxu0 0
        %1437 = vmatpush1.bf16.msra.mxu0 %v1042
        %1438 = vmatprep.subr.bf16.mxu0 0
        %1439 = vmatpush1.bf16.msra.mxu0 %v1045
        %1440 = vmatprep.subr.bf16.mxu0 0
        %1441 = vmatpush1.bf16.msra.mxu0 %v1048
        %1442 = vmatprep.subr.bf16.mxu0 0
        %1443 = vmatpush1.bf16.msra.mxu0 %v1051
        %1444 = vmatprep.subr.bf16.mxu0 0
        %1445 = vmatpush1.bf16.msra.mxu0 %v1054
        %1446 = vmatprep.subr.bf16.mxu0 0
        %1447 = vmatpush1.bf16.msra.mxu0 %v1057
        %1448 = vmatprep.subr.bf16.mxu0 0
        %1449 = vmatpush1.bf16.msra.mxu0 %v1060
        %1450 = vmatprep.subr.bf16.mxu0 0
        %1451 = vmatpush1.bf16.msra.mxu0 %v1063
        %1452 = vmatprep.subr.bf16.mxu0 0
        %1453 = vmatpush1.bf16.msra.mxu0 %v1066
        %1454 = vmatprep.mubr.bf16.mxu0 %v279
        %1455 = vmatmul.mubr.bf16.gmra.mrb[0].mxu0 %v278
        %v1456 = vpop.f32.mrb[0].mxu0
        %v1457 = vadd.f32 %v1417, %v1456
        %v1458 = vpop.f32.mrb[0].mxu0
        %v1459 = vpop.f32.mrb[0].mxu0
        %v1460 = vpop.f32.mrb[0].mxu0
        %1461 = vdwg.mxu0
        %1462 = vmatprep.subr.bf16.mxu0 0
        %1463 = vmatpush1.bf16.msra.mxu0 %v1069
        %1464 = vmatprep.subr.bf16.mxu0 0
        %1465 = vmatpush1.bf16.msra.mxu0 %v1072
        %1466 = vmatprep.subr.bf16.mxu0 0
        %1467 = vmatpush1.bf16.msra.mxu0 %v1075
        %1468 = vmatprep.subr.bf16.mxu0 0
        %1469 = vmatpush1.bf16.msra.mxu0 %v1078
        %1470 = vmatprep.subr.bf16.mxu0 0
        %1471 = vmatpush1.bf16.msra.mxu0 %v1081
        %1472 = vmatprep.subr.bf16.mxu0 0
        %1473 = vmatpush1.bf16.msra.mxu0 %v1084
        %1474 = vmatprep.subr.bf16.mxu0 0
        %1475 = vmatpush1.bf16.msra.mxu0 %v1087
        %1476 = vmatprep.subr.bf16.mxu0 0
        %1477 = vmatpush1.bf16.msra.mxu0 %v1090
        %1478 = vmatprep.subr.bf16.mxu0 0
        %1479 = vmatpush1.bf16.msra.mxu0 %v1093
        %1480 = vmatprep.subr.bf16.mxu0 0
        %1481 = vmatpush1.bf16.msra.mxu0 %v1096
        %1482 = vmatprep.subr.bf16.mxu0 0
        %1483 = vmatpush1.bf16.msra.mxu0 %v1099
        %1484 = vmatprep.subr.bf16.mxu0 0
        %1485 = vmatpush1.bf16.msra.mxu0 %v1102
        %1486 = vmatprep.subr.bf16.mxu0 0
        %1487 = vmatpush1.bf16.msra.mxu0 %v1105
        %1488 = vmatprep.subr.bf16.mxu0 0
        %1489 = vmatpush1.bf16.msra.mxu0 %v1108
        %1490 = vmatprep.subr.bf16.mxu0 0
        %1491 = vmatpush1.bf16.msra.mxu0 %v1111
        %1492 = vmatprep.subr.bf16.mxu0 0
        %1493 = vmatpush1.bf16.msra.mxu0 %v1114
        %1494 = vmatprep.mubr.bf16.mxu0 %v281
        %1495 = vmatmul.mubr.bf16.gmra.mrb[0].mxu0 %v280
        %v1496 = vpop.f32.mrb[0].mxu0
        %v1497 = vadd.f32 %v1457, %v1496
        %v1498 = vpop.f32.mrb[0].mxu0
        %v1499 = vpop.f32.mrb[0].mxu0
        %v1500 = vpop.f32.mrb[0].mxu0
        %1501 = vdwg.mxu0
        %v1502 = vmax.f32 %v1376, 0.0
        %v1503 = vmax.f32 %v1378, 0.0
        %v1504 = vmax.f32 %v1497, 0.0
        %v1508 = vcombine.low %v1502, %v1503
        %v1510 = vunpack.c.l.s4 1983009808
        %v1511 = vunpack.c.0.s8 %v1510
        %v1512 = vlaneseq
        %v1513 = vshrl.u32 %v1512, 7
        %v1514 = vsub.s32 %v1511, %v1513
        %v1515 = vrot.slane %v1508, %v1514
        %v1517 = vunpack.c.l.s4 1983009808
        %v1518 = vunpack.c.0.s8 %v1517
        %v1519 = vlaneseq
        %v1520 = vshrl.u32 %v1519, 7
        %v1521 = vsub.s32 %v1518, %v1520
        %v1522 = vrot.slane %v1504, %v1521
        %v1523 = vcombine.low %v1515, %v1522
        %1525 = vst [vmem:[%s236] sm:$0x3f] %v1523
        %s1526 = sand.u32 %s102, 1
        %s1527 = scalar_lea.sflag [#allocation4], %s1526
        %s1528 = sand.u32 %s102, 1
        %s1529 = smul.addr %s1528, 6
        %s1530 = scalar_lea.vmem [#allocation8], %s1529
        // Predicated region
        $region45: #{tpu_custom_call.1} parent=31 // pred_check
          %p1531 = pneg %p112
        $region46: #{tpu_custom_call.1} parent=31 // pred_check_branch
          %1533 = sbr.rel (%p1531) target = $region48
        $region47: #{tpu_custom_call.1} parent=31 // pred_region
          %s1534 = smul.u32 3, %s21
          %s1536 = ssub.s32 96, 96
          %1537 = vsyncadd %s1527, %s1536
          %s1538 = smul.addr %s1534, 32
          %s1539 = scalar_lea.hbm %s3, %s1538
          %s1541 = sshll.u32 %s1530, 4
          %s1542 = int_to_ptr.vmem [resolvable:$true] %s1541
          %1544 = dma.vmem_to_hbm [thread:$0]  %s1542, 96, %s1539, %s1527
        $region48: #{tpu_custom_call.1} parent=31 // pred_fallthru
          _
      $region32: #{tpu_custom_call.1} parent=5 // pred_fallthru
        _
      %p1545 = scmp.le.s32.totalorder 2, %s16
      // Predicated region
      $region49: #{tpu_custom_call.1} parent=5 // pred_check
        %p1546 = pneg %p1545
      $region50: #{tpu_custom_call.1} parent=5 // pred_check_branch
        %1548 = sbr.rel (%p1546) target = $region52
      $region51: #{tpu_custom_call.1} parent=5 // pred_region
        %s1549 = ssub.s32 %s16, 2
        // Predicated region
        $region53: #{tpu_custom_call.1} parent=51 // pred_check
          %p1550 = pneg %p118
        $region54: #{tpu_custom_call.1} parent=51 // pred_check_branch
          %1552 = sbr.rel (%p1550) target = $region56
        $region55: #{tpu_custom_call.1} parent=51 // pred_region
          %s1553 = sand.u32 %s103, 1
          %s1554 = scalar_lea.sflag [#allocation4], %s1553
          %s1555 = sand.u32 %s103, 1
          %s1556 = smul.addr %s1555, 6
          %s1557 = scalar_lea.vmem [#allocation8], %s1556
          %1558 = dma.done %s1554, 96
        $region56: #{tpu_custom_call.1} parent=51 // pred_fallthru
          _
      $region52: #{tpu_custom_call.1} parent=5 // pred_fallthru
        _
    $region6: #{tpu_custom_call.1} parent=1 // loop_footer
      %s20 = sadd.s32 1, %s16
    $region7: #{tpu_custom_call.1} parent=1 // loop_footer_branch
      %15 = sbr.rel target = $region3
    $region8: #{tpu_custom_call.1} parent=1 // loop_exit
      _
    %1559 = vsyncpa [#allocation3], 1
    %s1560 = scalar_lea.sflag [#allocation3], 1
    %1561 = vsyncpa %s1560, 1
    %1562 = vsyncpa [#allocation6], 1
    %s1563 = scalar_lea.sflag [#allocation6], 1
    %1564 = vsyncpa %s1563, 1
    %1565 = vsyncpa [#allocation4], 1
    %s1566 = scalar_lea.sflag [#allocation4], 1
    %1567 = vsyncpa %s1566, 1

</llo_original>
